<compile_context>
chip_gen: v7x
topology: tpu7x:2x2x1
jax: 0.10.0
libtpu: 0.0.40
codegen_flags: <defaults>
</compile_context>

<pallas_src>
import jax
import jax.numpy as jnp
from jax.experimental import pallas as pl
from jax.experimental.pallas import tpu as pltpu


def _make_fanout_kernel(V: int, F: int):
    """Kernel: V strided HBM->HBM DMAs, one per view, overlapped then joined."""

    def kernel(x_ref, *rest):
        # x_ref : (N, V*F) flattened input, left in place (pl.ANY).
        # rest  : V output refs (each (N, F), pl.ANY) followed by the DMA sems.
        out_refs = rest[:V]
        sem = rest[V]
        copies = []
        for v in range(V):  # V is small & static; loop is unrolled at trace time
            src = x_ref.at[:, pl.ds(v * F, F)]          # strided source rows
            cp = pltpu.make_async_copy(src, out_refs[v], sem.at[v])
            cp.start()
            copies.append(cp)
        for cp in copies:                               # join all V DMAs
            cp.wait()

    return kernel


def _fan_out_views(x_flat: jax.Array, V: int, F: int):
    """(N, V*F) batch-major slab -> tuple of V contiguous (N, F) view arrays."""
    N = x_flat.shape[0]
    kernel = _make_fanout_kernel(V, F)
    return pl.pallas_call(
        kernel,
        out_shape=tuple(
            jax.ShapeDtypeStruct((N, F), x_flat.dtype) for _ in range(V)
        ),
        in_specs=[pl.BlockSpec(memory_space=pl.ANY)],
        out_specs=tuple(pl.BlockSpec(memory_space=pl.ANY) for _ in range(V)),
        scratch_shapes=[pltpu.SemaphoreType.DMA((V,))],
    )(x_flat)


def four_view_resnet_forward(x: jax.Array, views_names, eval_mode: bool = True):
    """Pallas equivalent of FourViewResNet.forward with an Identity backbone."""
    # TODO(synk): the real feature extractors (resnet18/34/50, densenet121/169,
    # kim, convnext-T, gmic_resnet18) are external modules not defined in the
    # spec; per-view features therefore pass through Identity here.
    del eval_mode  # Identity path ignores eval_mode.

    if x.ndim == 5:
        N, V, C, H, W = x.shape
    elif x.ndim == 4:
        N, V, H, W = x.shape
        C = 1  # matches the PyTorch `.unsqueeze(1)` on 4-D inputs
    else:
        raise ValueError(f"expected 4-D or 5-D input, got shape {x.shape}")
    if len(views_names) != V:
        raise ValueError("len(views_names) must match the view axis of x")

    F = C * H * W
    x_flat = x.reshape(N, V * F)        # trailing-dim merge only: free

    feats = _fan_out_views(x_flat, V, F)  # tuple of V arrays, each (N, F)

    h_dict = {}
    for view in views_names:
        idx = views_names.index(view)     # same semantics as the PyTorch dict-comp
        h_dict[view] = feats[idx].reshape(N, C, H, W)  # free trailing-dim split
    return h_dict


if __name__ == "__main__":
    views_names = ["LCC", "LMLO", "RCC", "RMLO"]

    # 4-D input: (batch, num_views, H, W) -> per-view (batch, 1, H, W)
    x4 = jax.random.normal(jax.random.PRNGKey(0), (2, 4, 16, 16), dtype=jnp.float32)
    h4 = four_view_resnet_forward(x4, views_names, eval_mode=True)
    jax.block_until_ready(h4)
    for i, view in enumerate(views_names):
        expected = x4[:, i][:, None, :, :]
        assert h4[view].shape == (2, 1, 16, 16)
        assert h4[view].dtype == x4.dtype
        assert bool(jnp.array_equal(h4[view], expected))

    # 5-D input: (batch, num_views, C, H, W) -> per-view (batch, C, H, W)
    x5 = jax.random.normal(jax.random.PRNGKey(0), (2, 4, 3, 16, 16), dtype=jnp.float32)
    h5 = four_view_resnet_forward(x5, views_names, eval_mode=True)
    jax.block_until_ready(h5)
    for i, view in enumerate(views_names):
        expected = x5[:, i]
        assert h5[view].shape == (2, 3, 16, 16)
        assert bool(jnp.array_equal(h5[view], expected))

    # Non-128-aligned per-view size (F = 3*10*10 = 300): no padding, no slicing.
    x5b = jax.random.normal(jax.random.PRNGKey(0), (2, 4, 3, 10, 10), dtype=jnp.float32)
    h5b = four_view_resnet_forward(x5b, views_names, eval_mode=True)
    jax.block_until_ready(h5b)
    for i, view in enumerate(views_names):
        expected = x5b[:, i]
        assert h5b[view].shape == (2, 3, 10, 10)
        assert bool(jnp.array_equal(h5b[view], expected))

    print("KERNEL_OK")
</pallas_src>

<mosaic_0001>
module attributes {stable_mosaic.version = 11 : i64} {
  func.func @kernel(%arg0: memref<2x1024xf32, #tpu.memory_space<any>>, %arg1: memref<2x256xf32, #tpu.memory_space<any>>, %arg2: memref<2x256xf32, #tpu.memory_space<any>>, %arg3: memref<2x256xf32, #tpu.memory_space<any>>, %arg4: memref<2x256xf32, #tpu.memory_space<any>>, %arg5: memref<4x!tpu.dma_semaphore, #tpu.memory_space<semaphore_mem>>) attributes {dimension_semantics = [], scalar_prefetch = 0 : i64, scratch_operands = 1 : i64, tpu.core_type = #tpu.core_type<tc>} {
    %c0_i32 = arith.constant 0 : i32
    %c0_i32_0 = arith.constant 0 : i32
    %c0_i32_1 = arith.constant 0 : i32
    %0 = tpu.memref_slice %arg0[%c0_i32_0, %c0_i32_1] : memref<2x1024xf32, #tpu.memory_space<any>> -> memref<2x256xf32, #tpu.memory_space<any>>
    %1 = tpu.memref_slice %arg5[%c0_i32] : memref<4x!tpu.dma_semaphore, #tpu.memory_space<semaphore_mem>> -> memref<1x!tpu.dma_semaphore, #tpu.memory_space<semaphore_mem>>
    %2 = tpu.memref_squeeze %1 : memref<1x!tpu.dma_semaphore, #tpu.memory_space<semaphore_mem>> -> memref<!tpu.dma_semaphore, #tpu.memory_space<semaphore_mem>>
    tpu.enqueue_dma source(%0 : memref<2x256xf32, #tpu.memory_space<any>>) target(%arg1 : memref<2x256xf32, #tpu.memory_space<any>>) target_semaphore(%2 : memref<!tpu.dma_semaphore, #tpu.memory_space<semaphore_mem>>)
    %c1_i32 = arith.constant 1 : i32
    %c0_i32_2 = arith.constant 0 : i32
    %c256_i32 = arith.constant 256 : i32
    %3 = tpu.memref_slice %arg0[%c0_i32_2, %c256_i32] : memref<2x1024xf32, #tpu.memory_space<any>> -> memref<2x256xf32, #tpu.memory_space<any>>
    %4 = tpu.memref_slice %arg5[%c1_i32] : memref<4x!tpu.dma_semaphore, #tpu.memory_space<semaphore_mem>> -> memref<1x!tpu.dma_semaphore, #tpu.memory_space<semaphore_mem>>
    %5 = tpu.memref_squeeze %4 : memref<1x!tpu.dma_semaphore, #tpu.memory_space<semaphore_mem>> -> memref<!tpu.dma_semaphore, #tpu.memory_space<semaphore_mem>>
    tpu.enqueue_dma source(%3 : memref<2x256xf32, #tpu.memory_space<any>>) target(%arg2 : memref<2x256xf32, #tpu.memory_space<any>>) target_semaphore(%5 : memref<!tpu.dma_semaphore, #tpu.memory_space<semaphore_mem>>)
    %c2_i32 = arith.constant 2 : i32
    %c0_i32_3 = arith.constant 0 : i32
    %c512_i32 = arith.constant 512 : i32
    %6 = tpu.memref_slice %arg0[%c0_i32_3, %c512_i32] : memref<2x1024xf32, #tpu.memory_space<any>> -> memref<2x256xf32, #tpu.memory_space<any>>
    %7 = tpu.memref_slice %arg5[%c2_i32] : memref<4x!tpu.dma_semaphore, #tpu.memory_space<semaphore_mem>> -> memref<1x!tpu.dma_semaphore, #tpu.memory_space<semaphore_mem>>
    %8 = tpu.memref_squeeze %7 : memref<1x!tpu.dma_semaphore, #tpu.memory_space<semaphore_mem>> -> memref<!tpu.dma_semaphore, #tpu.memory_space<semaphore_mem>>
    tpu.enqueue_dma source(%6 : memref<2x256xf32, #tpu.memory_space<any>>) target(%arg3 : memref<2x256xf32, #tpu.memory_space<any>>) target_semaphore(%8 : memref<!tpu.dma_semaphore, #tpu.memory_space<semaphore_mem>>)
    %c3_i32 = arith.constant 3 : i32
    %c0_i32_4 = arith.constant 0 : i32
    %c768_i32 = arith.constant 768 : i32
    %9 = tpu.memref_slice %arg0[%c0_i32_4, %c768_i32] : memref<2x1024xf32, #tpu.memory_space<any>> -> memref<2x256xf32, #tpu.memory_space<any>>
    %10 = tpu.memref_slice %arg5[%c3_i32] : memref<4x!tpu.dma_semaphore, #tpu.memory_space<semaphore_mem>> -> memref<1x!tpu.dma_semaphore, #tpu.memory_space<semaphore_mem>>
    %11 = tpu.memref_squeeze %10 : memref<1x!tpu.dma_semaphore, #tpu.memory_space<semaphore_mem>> -> memref<!tpu.dma_semaphore, #tpu.memory_space<semaphore_mem>>
    tpu.enqueue_dma source(%9 : memref<2x256xf32, #tpu.memory_space<any>>) target(%arg4 : memref<2x256xf32, #tpu.memory_space<any>>) target_semaphore(%11 : memref<!tpu.dma_semaphore, #tpu.memory_space<semaphore_mem>>)
    %c0_i32_5 = arith.constant 0 : i32
    %c0_i32_6 = arith.constant 0 : i32
    %c0_i32_7 = arith.constant 0 : i32
    %12 = tpu.memref_slice %arg0[%c0_i32_6, %c0_i32_7] : memref<2x1024xf32, #tpu.memory_space<any>> -> memref<2x256xf32, #tpu.memory_space<any>>
    %13 = tpu.memref_slice %arg5[%c0_i32_5] : memref<4x!tpu.dma_semaphore, #tpu.memory_space<semaphore_mem>> -> memref<1x!tpu.dma_semaphore, #tpu.memory_space<semaphore_mem>>
    %14 = tpu.memref_squeeze %13 : memref<1x!tpu.dma_semaphore, #tpu.memory_space<semaphore_mem>> -> memref<!tpu.dma_semaphore, #tpu.memory_space<semaphore_mem>>
    tpu.wait_dma2 semaphore(%14 : memref<!tpu.dma_semaphore, #tpu.memory_space<semaphore_mem>>) src(%12 : memref<2x256xf32, #tpu.memory_space<any>>) dst(%arg1 : memref<2x256xf32, #tpu.memory_space<any>>)
    %c1_i32_8 = arith.constant 1 : i32
    %c0_i32_9 = arith.constant 0 : i32
    %c256_i32_10 = arith.constant 256 : i32
    %15 = tpu.memref_slice %arg0[%c0_i32_9, %c256_i32_10] : memref<2x1024xf32, #tpu.memory_space<any>> -> memref<2x256xf32, #tpu.memory_space<any>>
    %16 = tpu.memref_slice %arg5[%c1_i32_8] : memref<4x!tpu.dma_semaphore, #tpu.memory_space<semaphore_mem>> -> memref<1x!tpu.dma_semaphore, #tpu.memory_space<semaphore_mem>>
    %17 = tpu.memref_squeeze %16 : memref<1x!tpu.dma_semaphore, #tpu.memory_space<semaphore_mem>> -> memref<!tpu.dma_semaphore, #tpu.memory_space<semaphore_mem>>
    tpu.wait_dma2 semaphore(%17 : memref<!tpu.dma_semaphore, #tpu.memory_space<semaphore_mem>>) src(%15 : memref<2x256xf32, #tpu.memory_space<any>>) dst(%arg2 : memref<2x256xf32, #tpu.memory_space<any>>)
    %c2_i32_11 = arith.constant 2 : i32
    %c0_i32_12 = arith.constant 0 : i32
    %c512_i32_13 = arith.constant 512 : i32
    %18 = tpu.memref_slice %arg0[%c0_i32_12, %c512_i32_13] : memref<2x1024xf32, #tpu.memory_space<any>> -> memref<2x256xf32, #tpu.memory_space<any>>
    %19 = tpu.memref_slice %arg5[%c2_i32_11] : memref<4x!tpu.dma_semaphore, #tpu.memory_space<semaphore_mem>> -> memref<1x!tpu.dma_semaphore, #tpu.memory_space<semaphore_mem>>
    %20 = tpu.memref_squeeze %19 : memref<1x!tpu.dma_semaphore, #tpu.memory_space<semaphore_mem>> -> memref<!tpu.dma_semaphore, #tpu.memory_space<semaphore_mem>>
    tpu.wait_dma2 semaphore(%20 : memref<!tpu.dma_semaphore, #tpu.memory_space<semaphore_mem>>) src(%18 : memref<2x256xf32, #tpu.memory_space<any>>) dst(%arg3 : memref<2x256xf32, #tpu.memory_space<any>>)
    %c3_i32_14 = arith.constant 3 : i32
    %c0_i32_15 = arith.constant 0 : i32
    %c768_i32_16 = arith.constant 768 : i32
    %21 = tpu.memref_slice %arg0[%c0_i32_15, %c768_i32_16] : memref<2x1024xf32, #tpu.memory_space<any>> -> memref<2x256xf32, #tpu.memory_space<any>>
    %22 = tpu.memref_slice %arg5[%c3_i32_14] : memref<4x!tpu.dma_semaphore, #tpu.memory_space<semaphore_mem>> -> memref<1x!tpu.dma_semaphore, #tpu.memory_space<semaphore_mem>>
    %23 = tpu.memref_squeeze %22 : memref<1x!tpu.dma_semaphore, #tpu.memory_space<semaphore_mem>> -> memref<!tpu.dma_semaphore, #tpu.memory_space<semaphore_mem>>
    tpu.wait_dma2 semaphore(%23 : memref<!tpu.dma_semaphore, #tpu.memory_space<semaphore_mem>>) src(%21 : memref<2x256xf32, #tpu.memory_space<any>>) dst(%arg4 : memref<2x256xf32, #tpu.memory_space<any>>)
    return
  }
}

</mosaic_0001>

<llo_original>
// kernel: tpu_custom_call.1
$region0: #{tpu_custom_call.1}
  #allocation0 [shape = 'u32[]', space=smem, size = 0x4, offset = 0x4, fixed_abs, tag = 'smem constant byte address 0x4 - core index']
  #allocation1 [shape = 'u32[144,128]{1,0:T(1,128)}', space=vmem, size = 0x12000, scoped, tag = 'internal scratch']
  #allocation2 [shape = 's32[4]{0}', space=sflag, size = 0x10, scoped, tag = 'scratch operand']
  #allocation3 [shape = 's32[]', space=sflag, size = 0x4, offset = 0, fixed_abs, tag = 'sflag constant byte address 0x0 - dummy sync flag']
  #allocation4 [shape = 'u32[0]{0}', space=smem, size = 0, offset = 0, fixed_abs, tag = 'smem constant byte address 0x0 - null']
  #allocation5 [shape = 's32[]', space=sflag, size = 0x4, offset = 0, fixed_abs, tag = 'sflag constant byte address 0x0 - dummy sync flag']
  #allocation6 [shape = 'u32[0]{0}', space=smem, size = 0, offset = 0, fixed_abs, tag = 'smem constant byte address 0x0 - null']
  #allocation7 [shape = 's32[]', space=sflag, size = 0x4, offset = 0, fixed_abs, tag = 'sflag constant byte address 0x0 - dummy sync flag']
  #allocation8 [shape = 'u32[0]{0}', space=smem, size = 0, offset = 0, fixed_abs, tag = 'smem constant byte address 0x0 - null']
  #allocation9 [shape = 's32[]', space=sflag, size = 0x4, offset = 0, fixed_abs, tag = 'sflag constant byte address 0x0 - dummy sync flag']
  #allocation10 [shape = 'u32[0]{0}', space=smem, size = 0, offset = 0, fixed_abs, tag = 'smem constant byte address 0x0 - null']
  %s0 = inlined_call_operand.hbm [shape: f32[2,1024], index: 0, kind: input, shape index: {}]
  %s1 = inlined_call_operand.hbm [shape: f32[2,256], index: 1, kind: output, shape index: {0}]
  %s2 = inlined_call_operand.hbm [shape: f32[2,256], index: 2, kind: output, shape index: {1}]
  %s3 = inlined_call_operand.hbm [shape: f32[2,256], index: 3, kind: output, shape index: {2}]
  %s4 = inlined_call_operand.hbm [shape: f32[2,256], index: 4, kind: output, shape index: {3}]
  %5 = xla_tuple %s1, %s2, %s3, %s4
  %s6 = sld [smem:[#allocation0]]
  $region2: #{tpu_custom_call.1} parent=0
    _
  %s8 = ssub.s32 1, %s6
  %s9 = scalar_select 0, %s8, %s6
  %s11 = sshll.u32 1, 14
  %s12 = sxor.u32 4294967295, %s11
  %s15 = sshll.u32 3, 24
  %s16 = sxor.u32 4294967295, %s15
  %s17 = sand.u32 0, %s16
  %s19 = sor.u32 %s17, 0
  %22 = dma.general %s0, 64, %s1, [#allocation2], [#allocation3], [#allocation4], %s19, 0
  %s23 = scalar_lea.hbm %s0, 64
  %s24 = scalar_lea.sflag [#allocation2], 1
  %s26 = sshll.u32 1, 14
  %s27 = sxor.u32 4294967295, %s26
  %s30 = sshll.u32 3, 24
  %s31 = sxor.u32 4294967295, %s30
  %s32 = sand.u32 0, %s31
  %s34 = sor.u32 %s32, 0
  %37 = dma.general %s23, 64, %s2, %s24, [#allocation5], [#allocation6], %s34, 0
  %s38 = scalar_lea.hbm %s0, 128
  %s39 = scalar_lea.sflag [#allocation2], 2
  %s41 = sshll.u32 1, 14
  %s42 = sxor.u32 4294967295, %s41
  %s45 = sshll.u32 3, 24
  %s46 = sxor.u32 4294967295, %s45
  %s47 = sand.u32 0, %s46
  %s49 = sor.u32 %s47, 0
  %52 = dma.general %s38, 64, %s3, %s39, [#allocation7], [#allocation8], %s49, 0
  %s53 = scalar_lea.hbm %s0, 192
  %s54 = scalar_lea.sflag [#allocation2], 3
  %s56 = sshll.u32 1, 14
  %s57 = sxor.u32 4294967295, %s56
  %s60 = sshll.u32 3, 24
  %s61 = sxor.u32 4294967295, %s60
  %s62 = sand.u32 0, %s61
  %s64 = sor.u32 %s62, 0
  %67 = dma.general %s53, 64, %s4, %s54, [#allocation9], [#allocation10], %s64, 0
  %s68 = smul.u32 2, 1
  %s69 = smul.u32 %s68, 2
  %s70 = sshll.u32 %s69, 4
  %71 = dma.done [#allocation2], %s70
  %s72 = sshll.u32 %s69, 4
  %73 = dma.done %s24, %s72
  %s74 = sshll.u32 %s69, 4
  %75 = dma.done %s39, %s74
  %s76 = sshll.u32 %s69, 4
  %77 = dma.done %s54, %s76
  %78 = vsyncmov [#allocation2]
  %s79 = vpop.sfrf %78
  %p80 = scmp.eq.s32.totalorder %s79, 0
  %p81 = pneg %p80
  %83 = shalt.err (%p81)
  %s84 = scalar_lea.sflag [#allocation2], 1
  %85 = vsyncmov %s84
  %s86 = vpop.sfrf %85
  %p87 = scmp.eq.s32.totalorder %s86, 0
  %p88 = pneg %p87
  %90 = shalt.err (%p88)
  %s91 = scalar_lea.sflag [#allocation2], 2
  %92 = vsyncmov %s91
  %s93 = vpop.sfrf %92
  %p94 = scmp.eq.s32.totalorder %s93, 0
  %p95 = pneg %p94
  %97 = shalt.err (%p95)
  %s98 = scalar_lea.sflag [#allocation2], 3
  %99 = vsyncmov %s98
  %s100 = vpop.sfrf %99
  %p101 = scmp.eq.s32.totalorder %s100, 0
  %p102 = pneg %p101
  %104 = shalt.err (%p102)

</llo_original>
